<compile_context>
chip_gen: v5e
topology: v5e:2x2
jax: 0.10.0
libtpu: 0.0.40
codegen_flags: <defaults>
</compile_context>

<pallas_src>
import jax
import jax.numpy as jnp
from jax.experimental import pallas as pl
from jax.experimental.pallas import tpu as pltpu


def _linear_sub_relu_kernel(x_ref, w_ref, b_ref, o_ref):
    """Grid = (N_pad // tn [parallel], K_pad // tk [reduction])."""
    k = pl.program_id(1)

    @pl.when(k == 0)
    def _():
        o_ref[...] = jnp.zeros_like(o_ref)

    # Accumulate directly into the resident f32 output block.
    o_ref[...] += jnp.dot(
        x_ref[...], w_ref[...], preferred_element_type=jnp.float32
    )

    @pl.when(k == pl.num_programs(1) - 1)
    def _():
        y = o_ref[...] + b_ref[...]            # bias
        y = y - jnp.float32(0.236)             # t2 = t1 - 0.236
        o_ref[...] = jnp.maximum(y, 0.0)       # t3 = ReLU(t2)


def _round_up(a, b):
    return ((a + b - 1) // b) * b


def linear_sub_relu(x, weight, bias, *, tk=2048, tn=512):
    """x: (M, K) f32, weight: (N, K) f32 (PyTorch layout), bias: (N,) f32."""
    M, K = x.shape
    N, K2 = weight.shape
    assert K == K2 and bias.shape == (N,)

    # Clamp the K tile for small problems (must stay a multiple of 128 since
    # it is the lane dim of the x tile / sublane dim of the W tile).
    tk = min(tk, _round_up(K, 128))
    tn = min(tn, _round_up(N, 128))

    K_pad = _round_up(K, tk)
    N_pad = _round_up(N, tn)

    # Glue: transpose weight so lanes = output features; zero-pad K and N so
    # every tile is full and lane-dense. Zero padding is exact for the matmul;
    # padded output columns are sliced off below.
    w_t = weight.T                                        # (K, N)
    if K_pad != K or N_pad != N:
        w_t = jnp.pad(w_t, ((0, K_pad - K), (0, N_pad - N)))
    b2d = bias.reshape(1, N)
    if N_pad != N:
        b2d = jnp.pad(b2d, ((0, 0), (0, N_pad - N)))
    x_p = x if K_pad == K else jnp.pad(x, ((0, 0), (0, K_pad - K)))

    grid = (N_pad // tn, K_pad // tk)

    out_padded = pl.pallas_call(
        _linear_sub_relu_kernel,
        out_shape=jax.ShapeDtypeStruct((M, N_pad), jnp.float32),
        grid_spec=pl.GridSpec(
            grid=grid,
            in_specs=[
                pl.BlockSpec((M, tk), lambda j, k: (0, k)),    # x tile
                pl.BlockSpec((tk, tn), lambda j, k: (k, j)),   # W_T tile
                pl.BlockSpec((1, tn), lambda j, k: (0, j)),    # bias (resident over k)
            ],
            out_specs=pl.BlockSpec((M, tn), lambda j, k: (0, j)),  # accum-resident
        ),
        compiler_params=pltpu.CompilerParams(
            # N-axis parallel (uses both TCs on v7x), K-axis is the reduction.
            dimension_semantics=("parallel", "arbitrary"),
            # Enough for double-buffered (tk, tn) f32 weight tiles (2 x 4 MiB)
            # plus x / bias / output, while staying well within v7x's 64 MiB.
            vmem_limit_bytes=32 * 1024 * 1024,
        ),
    )(x_p, w_t, b2d)

    return out_padded[:, :N]


if __name__ == "__main__":
    # Small shapes consistent with the module: the original uses
    # in_features = 3*224*224, out_features = 1000.  We scale the spatial
    # size down to 16 (in_features = 3*16*16 = 768) and keep out = 1000.
    BATCH = 2
    IN_FEATURES = 3 * 16 * 16     # 768
    OUT_FEATURES = 1000

    key = jax.random.PRNGKey(0)
    kx, kw, kb = jax.random.split(key, 3)

    # Deterministic parameter init, mimicking torch.nn.Linear's default
    # U(-1/sqrt(in), 1/sqrt(in)) initialization.
    bound = 1.0 / (IN_FEATURES ** 0.5)
    weight = jax.random.uniform(
        kw, (OUT_FEATURES, IN_FEATURES), jnp.float32, -bound, bound
    )
    bias = jax.random.uniform(kb, (OUT_FEATURES,), jnp.float32, -bound, bound)

    x1 = jax.random.normal(kx, (BATCH, IN_FEATURES), jnp.float32)

    out = linear_sub_relu(x1, weight, bias)
    out = jax.block_until_ready(out)

    # Pure-JAX reference check.
    ref = jnp.maximum(x1 @ weight.T + bias - 0.236, 0.0)
    assert out.shape == (BATCH, OUT_FEATURES)
    assert jnp.allclose(out, ref, atol=1e-4, rtol=1e-4)

    print("KERNEL_OK")
</pallas_src>

<mosaic_0001>
module attributes {stable_mosaic.version = 11 : i64} {
  func.func @_linear_sub_relu_kernel(%arg0: i32, %arg1: i32, %arg2: memref<2x768xf32, #tpu.memory_space<vmem>>, %arg3: memref<768x512xf32, #tpu.memory_space<vmem>>, %arg4: memref<1x512xf32, #tpu.memory_space<vmem>>, %arg5: memref<2x512xf32, #tpu.memory_space<vmem>>) attributes {dimension_semantics = [#tpu.dimension_semantics<parallel>, #tpu.dimension_semantics<arbitrary>], iteration_bounds = array<i64: 2, 1>, scalar_prefetch = 0 : i64, scratch_operands = 0 : i64, tpu.core_type = #tpu.core_type<tc>, window_params = [{transform_indices = @transform_0, window_bounds = array<i64: 2, 768>}, {transform_indices = @transform_1, window_bounds = array<i64: 768, 512>}, {transform_indices = @transform_2, window_bounds = array<i64: 1, 512>}, {transform_indices = @transform_3, window_bounds = array<i64: 2, 512>}]} {
    %c0_i32 = arith.constant 0 : i32
    %0 = arith.cmpi eq, %arg1, %c0_i32 : i32
    %1 = arith.extui %0 : i1 to i32
    %c0_i32_0 = arith.constant 0 : i32
    %2 = arith.cmpi ne, %1, %c0_i32_0 : i32
    scf.if %2 {
      %cst_10 = arith.constant 0.000000e+00 : f32
      %12 = vector.broadcast %cst_10 : f32 to vector<2x512xf32>
      %c0_11 = arith.constant 0 : index
      %c0_12 = arith.constant 0 : index
      %13 = vector.load %arg5[%c0_11, %c0_12] : memref<2x512xf32, #tpu.memory_space<vmem>>, vector<2x512xf32>
      tpu.vector_store %arg5[%c0_11, %c0_12], %12 {strides = array<i32>} : memref<2x512xf32, #tpu.memory_space<vmem>>, vector<2x512xf32>,
    } else {
    }
    %c0 = arith.constant 0 : index
    %c0_1 = arith.constant 0 : index
    %3 = vector.load %arg5[%c0, %c0_1] : memref<2x512xf32, #tpu.memory_space<vmem>>, vector<2x512xf32>
    %c0_2 = arith.constant 0 : index
    %c0_3 = arith.constant 0 : index
    %4 = vector.load %arg2[%c0_2, %c0_3] : memref<2x768xf32, #tpu.memory_space<vmem>>, vector<2x768xf32>
    %c0_4 = arith.constant 0 : index
    %c0_5 = arith.constant 0 : index
    %5 = vector.load %arg3[%c0_4, %c0_5] : memref<768x512xf32, #tpu.memory_space<vmem>>, vector<768x512xf32>
    %cst = arith.constant dense<0.000000e+00> : vector<2x512xf32>
    %6 = tpu.matmul %4, %5, %cst {dimension_numbers = #tpu.dot_dimension_numbers<[1], [0], [0], [1], [0, 0, 1, 1], [], []>} : vector<2x768xf32>, vector<768x512xf32>, vector<2x512xf32> -> vector<2x512xf32>
    %7 = arith.addf %3, %6 : vector<2x512xf32>
    %c0_6 = arith.constant 0 : index
    %c0_7 = arith.constant 0 : index
    %8 = vector.load %arg5[%c0_6, %c0_7] : memref<2x512xf32, #tpu.memory_space<vmem>>, vector<2x512xf32>
    tpu.vector_store %arg5[%c0_6, %c0_7], %7 {strides = array<i32>} : memref<2x512xf32, #tpu.memory_space<vmem>>, vector<2x512xf32>,
    %c0_i32_8 = arith.constant 0 : i32
    %9 = arith.cmpi eq, %arg1, %c0_i32_8 : i32
    %10 = arith.extui %9 : i1 to i32
    %c0_i32_9 = arith.constant 0 : i32
    %11 = arith.cmpi ne, %10, %c0_i32_9 : i32
    scf.if %11 {
      %c0_10 = arith.constant 0 : index
      %c0_11 = arith.constant 0 : index
      %12 = vector.load %arg5[%c0_10, %c0_11] : memref<2x512xf32, #tpu.memory_space<vmem>>, vector<2x512xf32>
      %c0_12 = arith.constant 0 : index
      %c0_13 = arith.constant 0 : index
      %13 = vector.load %arg4[%c0_12, %c0_13] : memref<1x512xf32, #tpu.memory_space<vmem>>, vector<1x512xf32>
      %14 = vector.broadcast %13 : vector<1x512xf32> to vector<2x512xf32>
      %15 = arith.addf %12, %14 : vector<2x512xf32>
      %cst_14 = arith.constant 2.360000e-01 : f32
      %16 = vector.broadcast %cst_14 : f32 to vector<2x512xf32>
      %17 = arith.subf %15, %16 : vector<2x512xf32>
      %cst_15 = arith.constant 0.000000e+00 : f32
      %18 = vector.broadcast %cst_15 : f32 to vector<2x512xf32>
      %19 = arith.maximumf %17, %18 : vector<2x512xf32>
      %c0_16 = arith.constant 0 : index
      %c0_17 = arith.constant 0 : index
      %20 = vector.load %arg5[%c0_16, %c0_17] : memref<2x512xf32, #tpu.memory_space<vmem>>, vector<2x512xf32>
      tpu.vector_store %arg5[%c0_16, %c0_17], %19 {strides = array<i32>} : memref<2x512xf32, #tpu.memory_space<vmem>>, vector<2x512xf32>,
    } else {
    }
    return
  }
  func.func @transform_0(%arg0: i32, %arg1: i32) -> (i32, i32) {
    %c0_i32 = arith.constant 0 : i32
    %c0_i32_0 = arith.constant 0 : i32
    return %c0_i32, %arg1 : i32, i32
  }
  func.func @transform_1(%arg0: i32, %arg1: i32) -> (i32, i32) {
    %c0_i32 = arith.constant 0 : i32
    return %arg1, %arg0 : i32, i32
  }
  func.func @transform_2(%arg0: i32, %arg1: i32) -> (i32, i32) {
    %c0_i32 = arith.constant 0 : i32
    %c0_i32_0 = arith.constant 0 : i32
    return %c0_i32, %arg0 : i32, i32
  }
  func.func @transform_3(%arg0: i32, %arg1: i32) -> (i32, i32) {
    %c0_i32 = arith.constant 0 : i32
    %c0_i32_0 = arith.constant 0 : i32
    return %c0_i32, %arg0 : i32, i32
  }
}

</mosaic_0001>

<llo_original>
// kernel: tpu_custom_call.1
$region0: #{tpu_custom_call.1}
  #allocation0 [shape = 'u32[]', space=smem, size = 0x4, offset = 0x4, fixed_abs, tag = 'smem constant byte address 0x4 - core index']
  #allocation1 [shape = 'u32[72,128]{1,0:T(1,128)}', space=vmem, size = 0x9000, scoped, tag = 'internal scratch']
  %s0 = inlined_call_operand.hbm [shape: f32[2,768], index: 0, kind: input, shape index: {}]
  %s1 = inlined_call_operand.hbm [shape: f32[768,1024], index: 1, kind: input, shape index: {}]
  %s2 = inlined_call_operand.hbm [shape: f32[1,1024], index: 2, kind: input, shape index: {}]
  %s3 = inlined_call_operand.hbm [shape: f32[2,1024], index: 3, kind: output, shape index: {}]
  %s4 = sld [smem:[#allocation0]]
  $region65: #{tpu_custom_call.1} parent=0
    _
  %s6 = ssub.s32 1, %s4
  %s7 = scalar_select 0, %s6, %s4
  $region1: #{tpu_custom_call.1} parent=0
    #allocation2 [shape = 'u8[6144]{0}', space=vmem, size = 0x1800, scoped, tag = 'input window, operand 0, single buffered']
    #allocation3 [shape = 's32[2]{0}', space=sflag, size = 0x8, scoped, tag = 'scoped memory for tpu_custom_call.1']
    #allocation4 [shape = 's32[2]{0}', space=sflag, size = 0x8, scoped, tag = 'scoped memory for tpu_custom_call.1']
    #allocation5 [shape = 'u8[3145728]{0}', space=vmem, size = 0x300000, scoped, tag = 'input window, operand 1']
    #allocation6 [shape = 's32[2]{0}', space=sflag, size = 0x8, scoped, tag = 'scoped memory for tpu_custom_call.1']
    #allocation7 [shape = 'u8[4096]{0}', space=vmem, size = 0x1000, scoped, tag = 'input window, operand 2']
    #allocation8 [shape = 'u8[8192]{0}', space=vmem, size = 0x2000, scoped, tag = 'output window, operand 0']
    %8 = vsyncpa [#allocation3], 0
    %9 = vsyncpa [#allocation6], 0
    %s10 = scalar_lea.sflag [#allocation6], 1
    %11 = vsyncpa %s10, 0
    %12 = vsyncpa [#allocation4], 0
    %s13 = scalar_lea.sflag [#allocation4], 1
    %14 = vsyncpa %s13, 0
    loop: start=0, step=1, limit=4
    $region2: #{tpu_custom_call.1} parent=1 // loop_pre_header
      _
    $region3: #{tpu_custom_call.1} parent=1 // loop_header
      %s16 = sphi 0, %s20
      %p17 = scmp.ge.s32.totalorder %s16, 4
      %s23 = sphi 0, %s35
      %s24 = sphi 0, %s31
      %s25 = sphi 0, %s23
      %s26 = sphi 0, %s24
      %s27 = sphi 0, %s25
      %s28 = sphi 0, %s26
      %s38 = sphi 0, %s40
      %s41 = sphi 0, %s38
      %s42 = sphi 0, %s41
      %s58 = sphi 0, %s42
      %s66 = sphi 0, %s68
      %s69 = sphi 0, %s66
      %s70 = sphi 0, %s69
      %s86 = sphi 0, %s70
      %s92 = sphi 0, %s94
      %s95 = sphi 0, %s92
      %s96 = sphi 0, %s95
      %s112 = sphi 0, %s96
      %s118 = sphi 0, %s120
      %s121 = sphi 0, %s118
      %s122 = sphi 0, %s121
      %s138 = sphi 0, %s122
    $region4: #{tpu_custom_call.1} parent=1 // loop_header_branch
      %19 = sbr.rel (%p17) target = $region8
    $region5: #{tpu_custom_call.1} parent=1 // loop_body
      %s21 = ssub.s32 %s16, 1
      %s22 = ssub.s32 %s16, 2
      %s29 = sadd.s32 1, %s24
      %p30 = scmp.ge.s32.totalorder %s29, 1
      %s31 = scalar_select %p30, 0, %s29
      %s32 = sadd.s32 1, %s23
      %s33 = scalar_select %p30, %s32, %s23
      %p34 = scmp.ge.s32.totalorder %s33, 2
      %s35 = scalar_select %p34, 0, %s33
      %s36 = ssub.s32 %s24, %s31
      %p37 = scmp.eq.s32.totalorder %s36, 0
      %s39 = sadd.s32 %s38, 1
      %s40 = scalar_select %p37, %s38, %s39
      %p43 = pneg %p37
      %p44 = scmp.eq.s32.totalorder %s16, 1
      %p45 = por %p43, %p44
      %p46 = scmp.ne.s32.totalorder %s38, %s41
      %p47 = scmp.eq.s32.totalorder %s16, 0
      %p48 = por %p46, %p47
      %p49 = scmp.ne.s32.totalorder %s38, %s41
      %p50 = scmp.eq.s32.totalorder %s21, 1
      %p51 = por %p49, %p50
      %p52 = scmp.ne.s32.totalorder %s41, %s42
      %p53 = scmp.eq.s32.totalorder %s21, 0
      %p54 = por %p52, %p53
      %p55 = scmp.ne.s32.totalorder %s41, %s42
      %p56 = scmp.eq.s32.totalorder %s22, 1
      %p57 = por %p55, %p56
      %p59 = scmp.ne.s32.totalorder %s42, %s58
      %p60 = scmp.eq.s32.totalorder %s22, 0
      %p61 = por %p59, %p60
      %s62 = ssub.s32 %s24, %s31
      %s63 = ssub.s32 %s23, %s35
      %s64 = sor.u32 %s62, %s63
      %p65 = scmp.eq.s32.totalorder %s64, 0
      %s67 = sadd.s32 %s66, 1
      %s68 = scalar_select %p65, %s66, %s67
      %p71 = pneg %p65
      %p72 = scmp.eq.s32.totalorder %s16, 1
      %p73 = por %p71, %p72
      %p74 = scmp.ne.s32.totalorder %s66, %s69
      %p75 = scmp.eq.s32.totalorder %s16, 0
      %p76 = por %p74, %p75
      %p77 = scmp.ne.s32.totalorder %s66, %s69
      %p78 = scmp.eq.s32.totalorder %s21, 1
      %p79 = por %p77, %p78
      %p80 = scmp.ne.s32.totalorder %s69, %s70
      %p81 = scmp.eq.s32.totalorder %s21, 0
      %p82 = por %p80, %p81
      %p83 = scmp.ne.s32.totalorder %s69, %s70
      %p84 = scmp.eq.s32.totalorder %s22, 1
      %p85 = por %p83, %p84
      %p87 = scmp.ne.s32.totalorder %s70, %s86
      %p88 = scmp.eq.s32.totalorder %s22, 0
      %p89 = por %p87, %p88
      %s90 = ssub.s32 %s23, %s35
      %p91 = scmp.eq.s32.totalorder %s90, 0
      %s93 = sadd.s32 %s92, 1
      %s94 = scalar_select %p91, %s92, %s93
      %p97 = pneg %p91
      %p98 = scmp.eq.s32.totalorder %s16, 1
      %p99 = por %p97, %p98
      %p100 = scmp.ne.s32.totalorder %s92, %s95
      %p101 = scmp.eq.s32.totalorder %s16, 0
      %p102 = por %p100, %p101
      %p103 = scmp.ne.s32.totalorder %s92, %s95
      %p104 = scmp.eq.s32.totalorder %s21, 1
      %p105 = por %p103, %p104
      %p106 = scmp.ne.s32.totalorder %s95, %s96
      %p107 = scmp.eq.s32.totalorder %s21, 0
      %p108 = por %p106, %p107
      %p109 = scmp.ne.s32.totalorder %s95, %s96
      %p110 = scmp.eq.s32.totalorder %s22, 1
      %p111 = por %p109, %p110
      %p113 = scmp.ne.s32.totalorder %s96, %s112
      %p114 = scmp.eq.s32.totalorder %s22, 0
      %p115 = por %p113, %p114
      %s116 = ssub.s32 %s23, %s35
      %p117 = scmp.eq.s32.totalorder %s116, 0
      %s119 = sadd.s32 %s118, 1
      %s120 = scalar_select %p117, %s118, %s119
      %p123 = pneg %p117
      %p124 = scmp.eq.s32.totalorder %s16, 1
      %p125 = por %p123, %p124
      %p126 = scmp.ne.s32.totalorder %s118, %s121
      %p127 = scmp.eq.s32.totalorder %s16, 0
      %p128 = por %p126, %p127
      %p129 = scmp.ne.s32.totalorder %s118, %s121
      %p130 = scmp.eq.s32.totalorder %s21, 1
      %p131 = por %p129, %p130
      %p132 = scmp.ne.s32.totalorder %s121, %s122
      %p133 = scmp.eq.s32.totalorder %s21, 0
      %p134 = por %p132, %p133
      %p135 = scmp.ne.s32.totalorder %s121, %s122
      %p136 = scmp.eq.s32.totalorder %s22, 1
      %p137 = por %p135, %p136
      %p139 = scmp.ne.s32.totalorder %s122, %s138
      %p140 = scmp.eq.s32.totalorder %s22, 0
      %p141 = por %p139, %p140
      %p142 = scmp.le.s32.totalorder 1, %s16
      %p143 = scmp.lt.s32.totalorder %s16, 3
      %p144 = pnand %p142, %p143
      %p145 = pneg %p144
      // Predicated region
      $region9: #{tpu_custom_call.1} parent=5 // pred_check
        _
      $region10: #{tpu_custom_call.1} parent=5 // pred_check_branch
        %147 = sbr.rel (%p144) target = $region12
      $region11: #{tpu_custom_call.1} parent=5 // pred_region
        %s148 = ssub.s32 %s16, 1
        // Predicated region
        $region13: #{tpu_custom_call.1} parent=11 // pred_check
          %p149 = pneg %p54
        $region14: #{tpu_custom_call.1} parent=11 // pred_check_branch
          %151 = sbr.rel (%p149) target = $region16
        $region15: #{tpu_custom_call.1} parent=11 // pred_region
          %s152 = smul.u32 6, %s26
          %154 = vsyncadd [#allocation3], 0
          %s155 = smul.addr %s152, 2
          %s156 = scalar_lea.hbm %s0, %s155
          %s158 = sshll.u32 %s156, 4
          %s159 = int_to_ptr.hbm [resolvable:$true] %s158
          %s160 = sshll.u32 [#allocation2], 4
          %s161 = int_to_ptr.vmem [resolvable:$true] %s160
          %163 = dma.hbm_to_vmem [thread:$0]  %s159, 192, %s161, [#allocation3]
        $region16: #{tpu_custom_call.1} parent=11 // pred_fallthru
          _
      $region12: #{tpu_custom_call.1} parent=5 // pred_fallthru
        _
      %p164 = scmp.lt.s32.totalorder %s16, 2
      // Predicated region
      $region17: #{tpu_custom_call.1} parent=5 // pred_check
        %p165 = pneg %p164
      $region18: #{tpu_custom_call.1} parent=5 // pred_check_branch
        %167 = sbr.rel (%p165) target = $region20
      $region19: #{tpu_custom_call.1} parent=5 // pred_region
        // Predicated region
        $region21: #{tpu_custom_call.1} parent=19 // pred_check
          %p168 = pneg %p76
        $region22: #{tpu_custom_call.1} parent=19 // pred_check_branch
          %170 = sbr.rel (%p168) target = $region24
        $region23: #{tpu_custom_call.1} parent=19 // pred_region
          %s171 = sand.u32 %s16, 1
          %s172 = scalar_lea.sflag [#allocation6], %s171
          %s173 = sand.u32 %s66, 1
          %s174 = smul.addr %s173, 3072
          %s175 = scalar_lea.vmem [#allocation5], %s174
          %s176 = smul.u32 96, %s24
          %s177 = smul.u32 4, %s23
          %179 = vsyncadd %s172, 0
          %s180 = smul.addr %s176, 8
          %s181 = sadd.s32 %s177, %s180
          %s182 = smul.addr %s181, 8
          %s183 = scalar_lea.hbm %s1, %s182
          %s184 = sshll.u32 %s183, 4
          %s185 = int_to_ptr.hbm [resolvable:$true] %s184
          %s186 = sshll.u32 %s175, 4
          %s187 = int_to_ptr.vmem [resolvable:$true] %s186
          %192 = dma.hbm_to_vmem [thread:$0]  %s185, 49152, %s187, %s172, 1024, 512, 32
        $region24: #{tpu_custom_call.1} parent=19 // pred_fallthru
          _
        // Predicated region
        $region25: #{tpu_custom_call.1} parent=19 // pred_check
          %p193 = pneg %p102
        $region26: #{tpu_custom_call.1} parent=19 // pred_check_branch
          %195 = sbr.rel (%p193) target = $region28
        $region27: #{tpu_custom_call.1} parent=19 // pred_region
          %s196 = sand.u32 %s16, 1
          %s197 = scalar_lea.sflag [#allocation6], %s196
          %s198 = sand.u32 %s92, 1
          %s199 = smul.addr %s198, 4
          %s200 = scalar_lea.vmem [#allocation7], %s199
          %s201 = smul.u32 4, %s23
          %203 = vsyncadd %s197, 0
          %s204 = scalar_lea.hbm %s2, %s201
          %s206 = sshll.u32 %s204, 4
          %s207 = int_to_ptr.hbm [resolvable:$true] %s206
          %s208 = sshll.u32 %s200, 4
          %s209 = int_to_ptr.vmem [resolvable:$true] %s208
          %211 = dma.hbm_to_vmem [thread:$0]  %s207, 64, %s209, %s197
        $region28: #{tpu_custom_call.1} parent=19 // pred_fallthru
          _
      $region20: #{tpu_custom_call.1} parent=5 // pred_fallthru
        _
      %p212 = scmp.le.s32.totalorder 1, %s16
      %p213 = scmp.lt.s32.totalorder %s16, 3
      %p214 = pnand %p212, %p213
      %p215 = pneg %p214
      // Predicated region
      $region29: #{tpu_custom_call.1} parent=5 // pred_check
        _
      $region30: #{tpu_custom_call.1} parent=5 // pred_check_branch
        %217 = sbr.rel (%p214) target = $region32
      $region31: #{tpu_custom_call.1} parent=5 // pred_region
        %s218 = ssub.s32 %s16, 1
        // Predicated region
        $region33: #{tpu_custom_call.1} parent=31 // pred_check
          %p219 = pneg %p54
        $region34: #{tpu_custom_call.1} parent=31 // pred_check_branch
          %221 = sbr.rel (%p219) target = $region36
        $region35: #{tpu_custom_call.1} parent=31 // pred_region
          %223 = dma.done [#allocation3], 192
        $region36: #{tpu_custom_call.1} parent=31 // pred_fallthru
          _
        %s224 = sand.u32 %s21, 1
        %s225 = scalar_lea.sflag [#allocation6], %s224
        %s226 = sand.u32 %s69, 1
        %s227 = smul.addr %s226, 3072
        %s228 = scalar_lea.vmem [#allocation5], %s227
        // Predicated region
        $region37: #{tpu_custom_call.1} parent=31 // pred_check
          %p229 = pneg %p82
        $region38: #{tpu_custom_call.1} parent=31 // pred_check_branch
          %231 = sbr.rel (%p229) target = $region40
        $region39: #{tpu_custom_call.1} parent=31 // pred_region
          %233 = dma.done %s225, 49152
        $region40: #{tpu_custom_call.1} parent=31 // pred_fallthru
          _
        %s234 = sand.u32 %s21, 1
        %s235 = scalar_lea.sflag [#allocation6], %s234
        %s236 = sand.u32 %s95, 1
        %s237 = smul.addr %s236, 4
        %s238 = scalar_lea.vmem [#allocation7], %s237
        // Predicated region
        $region41: #{tpu_custom_call.1} parent=31 // pred_check
          %p239 = pneg %p108
        $region42: #{tpu_custom_call.1} parent=31 // pred_check_branch
          %241 = sbr.rel (%p239) target = $region44
        $region43: #{tpu_custom_call.1} parent=31 // pred_region
          %243 = dma.done %s235, 64
        $region44: #{tpu_custom_call.1} parent=31 // pred_fallthru
          _
        %p244 = pneg %p54
        %p245 = pneg %p51
        %s246 = sand.u32 %s21, 1
        %s247 = scalar_lea.sflag [#allocation6], %s246
        %s248 = sand.u32 %s69, 1
        %s249 = smul.addr %s248, 3072
        %s250 = scalar_lea.vmem [#allocation5], %s249
        %p251 = pneg %p82
        %p252 = pneg %p79
        %s253 = sand.u32 %s21, 1
        %s254 = scalar_lea.sflag [#allocation6], %s253
        %s255 = sand.u32 %s95, 1
        %s256 = smul.addr %s255, 4
        %s257 = scalar_lea.vmem [#allocation7], %s256
        %p258 = pneg %p108
        %p259 = pneg %p105
        %p260 = pneg %p134
        %p261 = pneg %p131
        %s262 = sand.u32 %s121, 1
        %s263 = scalar_lea.sflag [#allocation4], %s262
        %s264 = sand.u32 %s121, 1
        %s265 = smul.addr %s264, 8
        %s266 = scalar_lea.vmem [#allocation8], %s265
        %s267 = smul.u32 6, %s26
        %s268 = smul.u32 96, %s26
        %s269 = smul.u32 4, %s25
        %s270 = smul.u32 4, %s25
        %s271 = smul.u32 4, %s25
        %p272 = scmp.eq.s32.totalorder %s26, 0
        // Predicated region
        $region45: #{tpu_custom_call.1} parent=31 // pred_check
          %p273 = pneg %p272
        $region46: #{tpu_custom_call.1} parent=31 // pred_check_branch
          %275 = sbr.rel (%p273) target = $region48
        $region47: #{tpu_custom_call.1} parent=31 // pred_region
          %276 = vst [vmem:[%s266] sm:$0xff] 0.0
        $region48: #{tpu_custom_call.1} parent=31 // pred_fallthru
          _
        %v277 = vld [vmem:[%s266] sm:$0xff]
        %v278 = vld [vmem:[#allocation2] sm:$0xff]
        %v279 = vld [vmem:[#allocation2 + $0x8] sm:$0xf]
        %v280 = vld [vmem:[%s228] sm:$0xff]
        %v281 = vld [vmem:[%s228 + $0x8] sm:$0xff]
        %v282 = vld [vmem:[%s228 + $0x10] sm:$0xff]
        %v283 = vld [vmem:[%s228 + $0x18] sm:$0xff]
        %v284 = vld [vmem:[%s228 + $0x20] sm:$0xff]
        %v285 = vld [vmem:[%s228 + $0x28] sm:$0xff]
        %v286 = vld [vmem:[%s228 + $0x30] sm:$0xff]
        %v287 = vld [vmem:[%s228 + $0x38] sm:$0xff]
        %v288 = vld [vmem:[%s228 + $0x40] sm:$0xff]
        %v289 = vld [vmem:[%s228 + $0x48] sm:$0xff]
        %v290 = vld [vmem:[%s228 + $0x50] sm:$0xff]
        %v291 = vld [vmem:[%s228 + $0x58] sm:$0xff]
        %v292 = vld [vmem:[%s228 + $0x60] sm:$0xff]
        %v293 = vld [vmem:[%s228 + $0x68] sm:$0xff]
        %v294 = vld [vmem:[%s228 + $0x70] sm:$0xff]
        %v295 = vld [vmem:[%s228 + $0x78] sm:$0xff]
        %v296 = vld [vmem:[%s228 + $0x80] sm:$0xff]
        %v297 = vld [vmem:[%s228 + $0x88] sm:$0xff]
        %v298 = vld [vmem:[%s228 + $0x90] sm:$0xff]
        %v299 = vld [vmem:[%s228 + $0x98] sm:$0xff]
        %v300 = vld [vmem:[%s228 + $0xa0] sm:$0xff]
        %v301 = vld [vmem:[%s228 + $0xa8] sm:$0xff]
        %v302 = vld [vmem:[%s228 + $0xb0] sm:$0xff]
        %v303 = vld [vmem:[%s228 + $0xb8] sm:$0xff]
        %v304 = vld [vmem:[%s228 + $0xc0] sm:$0xff]
        %v305 = vld [vmem:[%s228 + $0xc8] sm:$0xff]
        %v306 = vld [vmem:[%s228 + $0xd0] sm:$0xff]
        %v307 = vld [vmem:[%s228 + $0xd8] sm:$0xff]
        %v308 = vld [vmem:[%s228 + $0xe0] sm:$0xff]
        %v309 = vld [vmem:[%s228 + $0xe8] sm:$0xff]
        %v310 = vld [vmem:[%s228 + $0xf0] sm:$0xff]
        %v311 = vld [vmem:[%s228 + $0xf8] sm:$0xff]
        %v312 = vld [vmem:[%s228 + $0x100] sm:$0xff]
        %v313 = vld [vmem:[%s228 + $0x108] sm:$0xff]
        %v314 = vld [vmem:[%s228 + $0x110] sm:$0xff]
        %v315 = vld [vmem:[%s228 + $0x118] sm:$0xff]
        %v316 = vld [vmem:[%s228 + $0x120] sm:$0xff]
        %v317 = vld [vmem:[%s228 + $0x128] sm:$0xff]
        %v318 = vld [vmem:[%s228 + $0x130] sm:$0xff]
        %v319 = vld [vmem:[%s228 + $0x138] sm:$0xff]
        %v320 = vld [vmem:[%s228 + $0x140] sm:$0xff]
        %v321 = vld [vmem:[%s228 + $0x148] sm:$0xff]
        %v322 = vld [vmem:[%s228 + $0x150] sm:$0xff]
        %v323 = vld [vmem:[%s228 + $0x158] sm:$0xff]
        %v324 = vld [vmem:[%s228 + $0x160] sm:$0xff]
        %v325 = vld [vmem:[%s228 + $0x168] sm:$0xff]
        %v326 = vld [vmem:[%s228 + $0x170] sm:$0xff]
        %v327 = vld [vmem:[%s228 + $0x178] sm:$0xff]
        %v328 = vld [vmem:[%s228 + $0x180] sm:$0xff]
        %v329 = vld [vmem:[%s228 + $0x188] sm:$0xff]
        %v330 = vld [vmem:[%s228 + $0x190] sm:$0xff]
        %v331 = vld [vmem:[%s228 + $0x198] sm:$0xff]
        %v332 = vld [vmem:[%s228 + $0x1a0] sm:$0xff]
        %v333 = vld [vmem:[%s228 + $0x1a8] sm:$0xff]
        %v334 = vld [vmem:[%s228 + $0x1b0] sm:$0xff]
        %v335 = vld [vmem:[%s228 + $0x1b8] sm:$0xff]
        %v336 = vld [vmem:[%s228 + $0x1c0] sm:$0xff]
        %v337 = vld [vmem:[%s228 + $0x1c8] sm:$0xff]
        %v338 = vld [vmem:[%s228 + $0x1d0] sm:$0xff]
        %v339 = vld [vmem:[%s228 + $0x1d8] sm:$0xff]
        %v340 = vld [vmem:[%s228 + $0x1e0] sm:$0xff]
        %v341 = vld [vmem:[%s228 + $0x1e8] sm:$0xff]
        %v342 = vld [vmem:[%s228 + $0x1f0] sm:$0xff]
        %v343 = vld [vmem:[%s228 + $0x1f8] sm:$0xff]
        %v344 = vld [vmem:[%s228 + $0x200] sm:$0xff]
        %v345 = vld [vmem:[%s228 + $0x208] sm:$0xff]
        %v346 = vld [vmem:[%s228 + $0x210] sm:$0xff]
        %v347 = vld [vmem:[%s228 + $0x218] sm:$0xff]
        %v348 = vld [vmem:[%s228 + $0x220] sm:$0xff]
        %v349 = vld [vmem:[%s228 + $0x228] sm:$0xff]
        %v350 = vld [vmem:[%s228 + $0x230] sm:$0xff]
        %v351 = vld [vmem:[%s228 + $0x238] sm:$0xff]
        %v352 = vld [vmem:[%s228 + $0x240] sm:$0xff]
        %v353 = vld [vmem:[%s228 + $0x248] sm:$0xff]
        %v354 = vld [vmem:[%s228 + $0x250] sm:$0xff]
        %v355 = vld [vmem:[%s228 + $0x258] sm:$0xff]
        %v356 = vld [vmem:[%s228 + $0x260] sm:$0xff]
        %v357 = vld [vmem:[%s228 + $0x268] sm:$0xff]
        %v358 = vld [vmem:[%s228 + $0x270] sm:$0xff]
        %v359 = vld [vmem:[%s228 + $0x278] sm:$0xff]
        %v360 = vld [vmem:[%s228 + $0x280] sm:$0xff]
        %v361 = vld [vmem:[%s228 + $0x288] sm:$0xff]
        %v362 = vld [vmem:[%s228 + $0x290] sm:$0xff]
        %v363 = vld [vmem:[%s228 + $0x298] sm:$0xff]
        %v364 = vld [vmem:[%s228 + $0x2a0] sm:$0xff]
        %v365 = vld [vmem:[%s228 + $0x2a8] sm:$0xff]
        %v366 = vld [vmem:[%s228 + $0x2b0] sm:$0xff]
        %v367 = vld [vmem:[%s228 + $0x2b8] sm:$0xff]
        %v368 = vld [vmem:[%s228 + $0x2c0] sm:$0xff]
        %v369 = vld [vmem:[%s228 + $0x2c8] sm:$0xff]
        %v370 = vld [vmem:[%s228 + $0x2d0] sm:$0xff]
        %v371 = vld [vmem:[%s228 + $0x2d8] sm:$0xff]
        %v372 = vld [vmem:[%s228 + $0x2e0] sm:$0xff]
        %v373 = vld [vmem:[%s228 + $0x2e8] sm:$0xff]
        %v374 = vld [vmem:[%s228 + $0x2f0] sm:$0xff]
        %v375 = vld [vmem:[%s228 + $0x2f8] sm:$0xff]
        %v376 = vld [vmem:[%s228 + $0x300] sm:$0xff]
        %v377 = vld [vmem:[%s228 + $0x308] sm:$0xff]
        %v378 = vld [vmem:[%s228 + $0x310] sm:$0xff]
        %v379 = vld [vmem:[%s228 + $0x318] sm:$0xff]
        %v380 = vld [vmem:[%s228 + $0x320] sm:$0xff]
        %v381 = vld [vmem:[%s228 + $0x328] sm:$0xff]
        %v382 = vld [vmem:[%s228 + $0x330] sm:$0xff]
        %v383 = vld [vmem:[%s228 + $0x338] sm:$0xff]
        %v384 = vld [vmem:[%s228 + $0x340] sm:$0xff]
        %v385 = vld [vmem:[%s228 + $0x348] sm:$0xff]
        %v386 = vld [vmem:[%s228 + $0x350] sm:$0xff]
        %v387 = vld [vmem:[%s228 + $0x358] sm:$0xff]
        %v388 = vld [vmem:[%s228 + $0x360] sm:$0xff]
        %v389 = vld [vmem:[%s228 + $0x368] sm:$0xff]
        %v390 = vld [vmem:[%s228 + $0x370] sm:$0xff]
        %v391 = vld [vmem:[%s228 + $0x378] sm:$0xff]
        %v392 = vld [vmem:[%s228 + $0x380] sm:$0xff]
        %v393 = vld [vmem:[%s228 + $0x388] sm:$0xff]
        %v394 = vld [vmem:[%s228 + $0x390] sm:$0xff]
        %v395 = vld [vmem:[%s228 + $0x398] sm:$0xff]
        %v396 = vld [vmem:[%s228 + $0x3a0] sm:$0xff]
        %v397 = vld [vmem:[%s228 + $0x3a8] sm:$0xff]
        %v398 = vld [vmem:[%s228 + $0x3b0] sm:$0xff]
        %v399 = vld [vmem:[%s228 + $0x3b8] sm:$0xff]
        %v400 = vld [vmem:[%s228 + $0x3c0] sm:$0xff]
        %v401 = vld [vmem:[%s228 + $0x3c8] sm:$0xff]
        %v402 = vld [vmem:[%s228 + $0x3d0] sm:$0xff]
        %v403 = vld [vmem:[%s228 + $0x3d8] sm:$0xff]
        %v404 = vld [vmem:[%s228 + $0x3e0] sm:$0xff]
        %v405 = vld [vmem:[%s228 + $0x3e8] sm:$0xff]
        %v406 = vld [vmem:[%s228 + $0x3f0] sm:$0xff]
        %v407 = vld [vmem:[%s228 + $0x3f8] sm:$0xff]
        %v408 = vld [vmem:[%s228 + $0x400] sm:$0xff]
        %v409 = vld [vmem:[%s228 + $0x408] sm:$0xff]
        %v410 = vld [vmem:[%s228 + $0x410] sm:$0xff]
        %v411 = vld [vmem:[%s228 + $0x418] sm:$0xff]
        %v412 = vld [vmem:[%s228 + $0x420] sm:$0xff]
        %v413 = vld [vmem:[%s228 + $0x428] sm:$0xff]
        %v414 = vld [vmem:[%s228 + $0x430] sm:$0xff]
        %v415 = vld [vmem:[%s228 + $0x438] sm:$0xff]
        %v416 = vld [vmem:[%s228 + $0x440] sm:$0xff]
        %v417 = vld [vmem:[%s228 + $0x448] sm:$0xff]
        %v418 = vld [vmem:[%s228 + $0x450] sm:$0xff]
        %v419 = vld [vmem:[%s228 + $0x458] sm:$0xff]
        %v420 = vld [vmem:[%s228 + $0x460] sm:$0xff]
        %v421 = vld [vmem:[%s228 + $0x468] sm:$0xff]
        %v422 = vld [vmem:[%s228 + $0x470] sm:$0xff]
        %v423 = vld [vmem:[%s228 + $0x478] sm:$0xff]
        %v424 = vld [vmem:[%s228 + $0x480] sm:$0xff]
        %v425 = vld [vmem:[%s228 + $0x488] sm:$0xff]
        %v426 = vld [vmem:[%s228 + $0x490] sm:$0xff]
        %v427 = vld [vmem:[%s228 + $0x498] sm:$0xff]
        %v428 = vld [vmem:[%s228 + $0x4a0] sm:$0xff]
        %v429 = vld [vmem:[%s228 + $0x4a8] sm:$0xff]
        %v430 = vld [vmem:[%s228 + $0x4b0] sm:$0xff]
        %v431 = vld [vmem:[%s228 + $0x4b8] sm:$0xff]
        %v432 = vld [vmem:[%s228 + $0x4c0] sm:$0xff]
        %v433 = vld [vmem:[%s228 + $0x4c8] sm:$0xff]
        %v434 = vld [vmem:[%s228 + $0x4d0] sm:$0xff]
        %v435 = vld [vmem:[%s228 + $0x4d8] sm:$0xff]
        %v436 = vld [vmem:[%s228 + $0x4e0] sm:$0xff]
        %v437 = vld [vmem:[%s228 + $0x4e8] sm:$0xff]
        %v438 = vld [vmem:[%s228 + $0x4f0] sm:$0xff]
        %v439 = vld [vmem:[%s228 + $0x4f8] sm:$0xff]
        %v440 = vld [vmem:[%s228 + $0x500] sm:$0xff]
        %v441 = vld [vmem:[%s228 + $0x508] sm:$0xff]
        %v442 = vld [vmem:[%s228 + $0x510] sm:$0xff]
        %v443 = vld [vmem:[%s228 + $0x518] sm:$0xff]
        %v444 = vld [vmem:[%s228 + $0x520] sm:$0xff]
        %v445 = vld [vmem:[%s228 + $0x528] sm:$0xff]
        %v446 = vld [vmem:[%s228 + $0x530] sm:$0xff]
        %v447 = vld [vmem:[%s228 + $0x538] sm:$0xff]
        %v448 = vld [vmem:[%s228 + $0x540] sm:$0xff]
        %v449 = vld [vmem:[%s228 + $0x548] sm:$0xff]
        %v450 = vld [vmem:[%s228 + $0x550] sm:$0xff]
        %v451 = vld [vmem:[%s228 + $0x558] sm:$0xff]
        %v452 = vld [vmem:[%s228 + $0x560] sm:$0xff]
        %v453 = vld [vmem:[%s228 + $0x568] sm:$0xff]
        %v454 = vld [vmem:[%s228 + $0x570] sm:$0xff]
        %v455 = vld [vmem:[%s228 + $0x578] sm:$0xff]
        %v456 = vld [vmem:[%s228 + $0x580] sm:$0xff]
        %v457 = vld [vmem:[%s228 + $0x588] sm:$0xff]
        %v458 = vld [vmem:[%s228 + $0x590] sm:$0xff]
        %v459 = vld [vmem:[%s228 + $0x598] sm:$0xff]
        %v460 = vld [vmem:[%s228 + $0x5a0] sm:$0xff]
        %v461 = vld [vmem:[%s228 + $0x5a8] sm:$0xff]
        %v462 = vld [vmem:[%s228 + $0x5b0] sm:$0xff]
        %v463 = vld [vmem:[%s228 + $0x5b8] sm:$0xff]
        %v464 = vld [vmem:[%s228 + $0x5c0] sm:$0xff]
        %v465 = vld [vmem:[%s228 + $0x5c8] sm:$0xff]
        %v466 = vld [vmem:[%s228 + $0x5d0] sm:$0xff]
        %v467 = vld [vmem:[%s228 + $0x5d8] sm:$0xff]
        %v468 = vld [vmem:[%s228 + $0x5e0] sm:$0xff]
        %v469 = vld [vmem:[%s228 + $0x5e8] sm:$0xff]
        %v470 = vld [vmem:[%s228 + $0x5f0] sm:$0xff]
        %v471 = vld [vmem:[%s228 + $0x5f8] sm:$0xff]
        %v472 = vld [vmem:[%s228 + $0x600] sm:$0xff]
        %v473 = vld [vmem:[%s228 + $0x608] sm:$0xff]
        %v474 = vld [vmem:[%s228 + $0x610] sm:$0xff]
        %v475 = vld [vmem:[%s228 + $0x618] sm:$0xff]
        %v476 = vld [vmem:[%s228 + $0x620] sm:$0xff]
        %v477 = vld [vmem:[%s228 + $0x628] sm:$0xff]
        %v478 = vld [vmem:[%s228 + $0x630] sm:$0xff]
        %v479 = vld [vmem:[%s228 + $0x638] sm:$0xff]
        %v480 = vld [vmem:[%s228 + $0x640] sm:$0xff]
        %v481 = vld [vmem:[%s228 + $0x648] sm:$0xff]
        %v482 = vld [vmem:[%s228 + $0x650] sm:$0xff]
        %v483 = vld [vmem:[%s228 + $0x658] sm:$0xff]
        %v484 = vld [vmem:[%s228 + $0x660] sm:$0xff]
        %v485 = vld [vmem:[%s228 + $0x668] sm:$0xff]
        %v486 = vld [vmem:[%s228 + $0x670] sm:$0xff]
        %v487 = vld [vmem:[%s228 + $0x678] sm:$0xff]
        %v488 = vld [vmem:[%s228 + $0x680] sm:$0xff]
        %v489 = vld [vmem:[%s228 + $0x688] sm:$0xff]
        %v490 = vld [vmem:[%s228 + $0x690] sm:$0xff]
        %v491 = vld [vmem:[%s228 + $0x698] sm:$0xff]
        %v492 = vld [vmem:[%s228 + $0x6a0] sm:$0xff]
        %v493 = vld [vmem:[%s228 + $0x6a8] sm:$0xff]
        %v494 = vld [vmem:[%s228 + $0x6b0] sm:$0xff]
        %v495 = vld [vmem:[%s228 + $0x6b8] sm:$0xff]
        %v496 = vld [vmem:[%s228 + $0x6c0] sm:$0xff]
        %v497 = vld [vmem:[%s228 + $0x6c8] sm:$0xff]
        %v498 = vld [vmem:[%s228 + $0x6d0] sm:$0xff]
        %v499 = vld [vmem:[%s228 + $0x6d8] sm:$0xff]
        %v500 = vld [vmem:[%s228 + $0x6e0] sm:$0xff]
        %v501 = vld [vmem:[%s228 + $0x6e8] sm:$0xff]
        %v502 = vld [vmem:[%s228 + $0x6f0] sm:$0xff]
        %v503 = vld [vmem:[%s228 + $0x6f8] sm:$0xff]
        %v504 = vld [vmem:[%s228 + $0x700] sm:$0xff]
        %v505 = vld [vmem:[%s228 + $0x708] sm:$0xff]
        %v506 = vld [vmem:[%s228 + $0x710] sm:$0xff]
        %v507 = vld [vmem:[%s228 + $0x718] sm:$0xff]
        %v508 = vld [vmem:[%s228 + $0x720] sm:$0xff]
        %v509 = vld [vmem:[%s228 + $0x728] sm:$0xff]
        %v510 = vld [vmem:[%s228 + $0x730] sm:$0xff]
        %v511 = vld [vmem:[%s228 + $0x738] sm:$0xff]
        %v512 = vld [vmem:[%s228 + $0x740] sm:$0xff]
        %v513 = vld [vmem:[%s228 + $0x748] sm:$0xff]
        %v514 = vld [vmem:[%s228 + $0x750] sm:$0xff]
        %v515 = vld [vmem:[%s228 + $0x758] sm:$0xff]
        %v516 = vld [vmem:[%s228 + $0x760] sm:$0xff]
        %v517 = vld [vmem:[%s228 + $0x768] sm:$0xff]
        %v518 = vld [vmem:[%s228 + $0x770] sm:$0xff]
        %v519 = vld [vmem:[%s228 + $0x778] sm:$0xff]
        %v520 = vld [vmem:[%s228 + $0x780] sm:$0xff]
        %v521 = vld [vmem:[%s228 + $0x788] sm:$0xff]
        %v522 = vld [vmem:[%s228 + $0x790] sm:$0xff]
        %v523 = vld [vmem:[%s228 + $0x798] sm:$0xff]
        %v524 = vld [vmem:[%s228 + $0x7a0] sm:$0xff]
        %v525 = vld [vmem:[%s228 + $0x7a8] sm:$0xff]
        %v526 = vld [vmem:[%s228 + $0x7b0] sm:$0xff]
        %v527 = vld [vmem:[%s228 + $0x7b8] sm:$0xff]
        %v528 = vld [vmem:[%s228 + $0x7c0] sm:$0xff]
        %v529 = vld [vmem:[%s228 + $0x7c8] sm:$0xff]
        %v530 = vld [vmem:[%s228 + $0x7d0] sm:$0xff]
        %v531 = vld [vmem:[%s228 + $0x7d8] sm:$0xff]
        %v532 = vld [vmem:[%s228 + $0x7e0] sm:$0xff]
        %v533 = vld [vmem:[%s228 + $0x7e8] sm:$0xff]
        %v534 = vld [vmem:[%s228 + $0x7f0] sm:$0xff]
        %v535 = vld [vmem:[%s228 + $0x7f8] sm:$0xff]
        %v536 = vld [vmem:[%s228 + $0x800] sm:$0xff]
        %v537 = vld [vmem:[%s228 + $0x808] sm:$0xff]
        %v538 = vld [vmem:[%s228 + $0x810] sm:$0xff]
        %v539 = vld [vmem:[%s228 + $0x818] sm:$0xff]
        %v540 = vld [vmem:[%s228 + $0x820] sm:$0xff]
        %v541 = vld [vmem:[%s228 + $0x828] sm:$0xff]
        %v542 = vld [vmem:[%s228 + $0x830] sm:$0xff]
        %v543 = vld [vmem:[%s228 + $0x838] sm:$0xff]
        %v544 = vld [vmem:[%s228 + $0x840] sm:$0xff]
        %v545 = vld [vmem:[%s228 + $0x848] sm:$0xff]
        %v546 = vld [vmem:[%s228 + $0x850] sm:$0xff]
        %v547 = vld [vmem:[%s228 + $0x858] sm:$0xff]
        %v548 = vld [vmem:[%s228 + $0x860] sm:$0xff]
        %v549 = vld [vmem:[%s228 + $0x868] sm:$0xff]
        %v550 = vld [vmem:[%s228 + $0x870] sm:$0xff]
        %v551 = vld [vmem:[%s228 + $0x878] sm:$0xff]
        %v552 = vld [vmem:[%s228 + $0x880] sm:$0xff]
        %v553 = vld [vmem:[%s228 + $0x888] sm:$0xff]
        %v554 = vld [vmem:[%s228 + $0x890] sm:$0xff]
        %v555 = vld [vmem:[%s228 + $0x898] sm:$0xff]
        %v556 = vld [vmem:[%s228 + $0x8a0] sm:$0xff]
        %v557 = vld [vmem:[%s228 + $0x8a8] sm:$0xff]
        %v558 = vld [vmem:[%s228 + $0x8b0] sm:$0xff]
        %v559 = vld [vmem:[%s228 + $0x8b8] sm:$0xff]
        %v560 = vld [vmem:[%s228 + $0x8c0] sm:$0xff]
        %v561 = vld [vmem:[%s228 + $0x8c8] sm:$0xff]
        %v562 = vld [vmem:[%s228 + $0x8d0] sm:$0xff]
        %v563 = vld [vmem:[%s228 + $0x8d8] sm:$0xff]
        %v564 = vld [vmem:[%s228 + $0x8e0] sm:$0xff]
        %v565 = vld [vmem:[%s228 + $0x8e8] sm:$0xff]
        %v566 = vld [vmem:[%s228 + $0x8f0] sm:$0xff]
        %v567 = vld [vmem:[%s228 + $0x8f8] sm:$0xff]
        %v568 = vld [vmem:[%s228 + $0x900] sm:$0xff]
        %v569 = vld [vmem:[%s228 + $0x908] sm:$0xff]
        %v570 = vld [vmem:[%s228 + $0x910] sm:$0xff]
        %v571 = vld [vmem:[%s228 + $0x918] sm:$0xff]
        %v572 = vld [vmem:[%s228 + $0x920] sm:$0xff]
        %v573 = vld [vmem:[%s228 + $0x928] sm:$0xff]
        %v574 = vld [vmem:[%s228 + $0x930] sm:$0xff]
        %v575 = vld [vmem:[%s228 + $0x938] sm:$0xff]
        %v576 = vld [vmem:[%s228 + $0x940] sm:$0xff]
        %v577 = vld [vmem:[%s228 + $0x948] sm:$0xff]
        %v578 = vld [vmem:[%s228 + $0x950] sm:$0xff]
        %v579 = vld [vmem:[%s228 + $0x958] sm:$0xff]
        %v580 = vld [vmem:[%s228 + $0x960] sm:$0xff]
        %v581 = vld [vmem:[%s228 + $0x968] sm:$0xff]
        %v582 = vld [vmem:[%s228 + $0x970] sm:$0xff]
        %v583 = vld [vmem:[%s228 + $0x978] sm:$0xff]
        %v584 = vld [vmem:[%s228 + $0x980] sm:$0xff]
        %v585 = vld [vmem:[%s228 + $0x988] sm:$0xff]
        %v586 = vld [vmem:[%s228 + $0x990] sm:$0xff]
        %v587 = vld [vmem:[%s228 + $0x998] sm:$0xff]
        %v588 = vld [vmem:[%s228 + $0x9a0] sm:$0xff]
        %v589 = vld [vmem:[%s228 + $0x9a8] sm:$0xff]
        %v590 = vld [vmem:[%s228 + $0x9b0] sm:$0xff]
        %v591 = vld [vmem:[%s228 + $0x9b8] sm:$0xff]
        %v592 = vld [vmem:[%s228 + $0x9c0] sm:$0xff]
        %v593 = vld [vmem:[%s228 + $0x9c8] sm:$0xff]
        %v594 = vld [vmem:[%s228 + $0x9d0] sm:$0xff]
        %v595 = vld [vmem:[%s228 + $0x9d8] sm:$0xff]
        %v596 = vld [vmem:[%s228 + $0x9e0] sm:$0xff]
        %v597 = vld [vmem:[%s228 + $0x9e8] sm:$0xff]
        %v598 = vld [vmem:[%s228 + $0x9f0] sm:$0xff]
        %v599 = vld [vmem:[%s228 + $0x9f8] sm:$0xff]
        %v600 = vld [vmem:[%s228 + $0xa00] sm:$0xff]
        %v601 = vld [vmem:[%s228 + $0xa08] sm:$0xff]
        %v602 = vld [vmem:[%s228 + $0xa10] sm:$0xff]
        %v603 = vld [vmem:[%s228 + $0xa18] sm:$0xff]
        %v604 = vld [vmem:[%s228 + $0xa20] sm:$0xff]
        %v605 = vld [vmem:[%s228 + $0xa28] sm:$0xff]
        %v606 = vld [vmem:[%s228 + $0xa30] sm:$0xff]
        %v607 = vld [vmem:[%s228 + $0xa38] sm:$0xff]
        %v608 = vld [vmem:[%s228 + $0xa40] sm:$0xff]
        %v609 = vld [vmem:[%s228 + $0xa48] sm:$0xff]
        %v610 = vld [vmem:[%s228 + $0xa50] sm:$0xff]
        %v611 = vld [vmem:[%s228 + $0xa58] sm:$0xff]
        %v612 = vld [vmem:[%s228 + $0xa60] sm:$0xff]
        %v613 = vld [vmem:[%s228 + $0xa68] sm:$0xff]
        %v614 = vld [vmem:[%s228 + $0xa70] sm:$0xff]
        %v615 = vld [vmem:[%s228 + $0xa78] sm:$0xff]
        %v616 = vld [vmem:[%s228 + $0xa80] sm:$0xff]
        %v617 = vld [vmem:[%s228 + $0xa88] sm:$0xff]
        %v618 = vld [vmem:[%s228 + $0xa90] sm:$0xff]
        %v619 = vld [vmem:[%s228 + $0xa98] sm:$0xff]
        %v620 = vld [vmem:[%s228 + $0xaa0] sm:$0xff]
        %v621 = vld [vmem:[%s228 + $0xaa8] sm:$0xff]
        %v622 = vld [vmem:[%s228 + $0xab0] sm:$0xff]
        %v623 = vld [vmem:[%s228 + $0xab8] sm:$0xff]
        %v624 = vld [vmem:[%s228 + $0xac0] sm:$0xff]
        %v625 = vld [vmem:[%s228 + $0xac8] sm:$0xff]
        %v626 = vld [vmem:[%s228 + $0xad0] sm:$0xff]
        %v627 = vld [vmem:[%s228 + $0xad8] sm:$0xff]
        %v628 = vld [vmem:[%s228 + $0xae0] sm:$0xff]
        %v629 = vld [vmem:[%s228 + $0xae8] sm:$0xff]
        %v630 = vld [vmem:[%s228 + $0xaf0] sm:$0xff]
        %v631 = vld [vmem:[%s228 + $0xaf8] sm:$0xff]
        %v632 = vld [vmem:[%s228 + $0xb00] sm:$0xff]
        %v633 = vld [vmem:[%s228 + $0xb08] sm:$0xff]
        %v634 = vld [vmem:[%s228 + $0xb10] sm:$0xff]
        %v635 = vld [vmem:[%s228 + $0xb18] sm:$0xff]
        %v636 = vld [vmem:[%s228 + $0xb20] sm:$0xff]
        %v637 = vld [vmem:[%s228 + $0xb28] sm:$0xff]
        %v638 = vld [vmem:[%s228 + $0xb30] sm:$0xff]
        %v639 = vld [vmem:[%s228 + $0xb38] sm:$0xff]
        %v640 = vld [vmem:[%s228 + $0xb40] sm:$0xff]
        %v641 = vld [vmem:[%s228 + $0xb48] sm:$0xff]
        %v642 = vld [vmem:[%s228 + $0xb50] sm:$0xff]
        %v643 = vld [vmem:[%s228 + $0xb58] sm:$0xff]
        %v644 = vld [vmem:[%s228 + $0xb60] sm:$0xff]
        %v645 = vld [vmem:[%s228 + $0xb68] sm:$0xff]
        %v646 = vld [vmem:[%s228 + $0xb70] sm:$0xff]
        %v647 = vld [vmem:[%s228 + $0xb78] sm:$0xff]
        %v648 = vld [vmem:[%s228 + $0xb80] sm:$0xff]
        %v649 = vld [vmem:[%s228 + $0xb88] sm:$0xff]
        %v650 = vld [vmem:[%s228 + $0xb90] sm:$0xff]
        %v651 = vld [vmem:[%s228 + $0xb98] sm:$0xff]
        %v652 = vld [vmem:[%s228 + $0xba0] sm:$0xff]
        %v653 = vld [vmem:[%s228 + $0xba8] sm:$0xff]
        %v654 = vld [vmem:[%s228 + $0xbb0] sm:$0xff]
        %v655 = vld [vmem:[%s228 + $0xbb8] sm:$0xff]
        %v656 = vld [vmem:[%s228 + $0xbc0] sm:$0xff]
        %v657 = vld [vmem:[%s228 + $0xbc8] sm:$0xff]
        %v658 = vld [vmem:[%s228 + $0xbd0] sm:$0xff]
        %v659 = vld [vmem:[%s228 + $0xbd8] sm:$0xff]
        %v660 = vld [vmem:[%s228 + $0xbe0] sm:$0xff]
        %v661 = vld [vmem:[%s228 + $0xbe8] sm:$0xff]
        %v662 = vld [vmem:[%s228 + $0xbf0] sm:$0xff]
        %v663 = vld [vmem:[%s228 + $0xbf8] sm:$0xff]
        %666 = vst [vmem:[#allocation1] ss:$4 sm:$0xff] %v278
        %s667 = scalar_lea.vmem [#allocation1], 32
        %668 = vst [vmem:[%s667] ss:$4 sm:$0xff] %v279
        %v669 = vld.sshfl [vmem:[#allocation1] sm:$0xff pattern:$0x73625140]
        %v670 = vld.sshfl [vmem:[#allocation1 + $0x8] sm:$0xff pattern:$0x73625140]
        %v671 = vld.sshfl [vmem:[#allocation1 + $0x10] sm:$0xff pattern:$0x73625140]
        %v672 = vld.sshfl [vmem:[#allocation1 + $0x18] sm:$0xff pattern:$0x73625140]
        %v673 = vld.sshfl [vmem:[#allocation1 + $0x20] sm:$0xff pattern:$0x73625140]
        %v674 = vld.sshfl [vmem:[#allocation1 + $0x28] sm:$0xff pattern:$0x73625140]
        %681 = vmatpush.msra.mxu0 %v340
        %682 = vmatpush.msra.mxu0 %v336
        %683 = vmatpush.msra.mxu0 %v332
        %684 = vmatpush.msra.mxu0 %v328
        %685 = vmatpush.msra.mxu0 %v324
        %686 = vmatpush.msra.mxu0 %v320
        %687 = vmatpush.msra.mxu0 %v316
        %688 = vmatpush.msra.mxu0 %v312
        %689 = vmatpush.msra.mxu0 %v308
        %690 = vmatpush.msra.mxu0 %v304
        %691 = vmatpush.msra.mxu0 %v300
        %692 = vmatpush.msra.mxu0 %v296
        %693 = vmatpush.msra.mxu0 %v292
        %694 = vmatpush.msra.mxu0 %v288
        %695 = vmatpush.msra.mxu0 %v284
        %696 = vmatpush.msra.mxu0 %v280
        %697 = vmatmul.f32.gmra.mxu0 %v669
        %v698 = vpop.f32.mrf.mxu0
        %v699 = vadd.f32 0.0, %v698
        %700 = vdwg.mxu0
        %701 = vmatpush.msra.mxu0 %v404
        %702 = vmatpush.msra.mxu0 %v400
        %703 = vmatpush.msra.mxu0 %v396
        %704 = vmatpush.msra.mxu0 %v392
        %705 = vmatpush.msra.mxu0 %v388
        %706 = vmatpush.msra.mxu0 %v384
        %707 = vmatpush.msra.mxu0 %v380
        %708 = vmatpush.msra.mxu0 %v376
        %709 = vmatpush.msra.mxu0 %v372
        %710 = vmatpush.msra.mxu0 %v368
        %711 = vmatpush.msra.mxu0 %v364
        %712 = vmatpush.msra.mxu0 %v360
        %713 = vmatpush.msra.mxu0 %v356
        %714 = vmatpush.msra.mxu0 %v352
        %715 = vmatpush.msra.mxu0 %v348
        %716 = vmatpush.msra.mxu0 %v344
        %717 = vmatmul.f32.gmra.mxu0 %v670
        %v718 = vpop.f32.mrf.mxu0
        %v719 = vadd.f32 %v699, %v718
        %720 = vdwg.mxu0
        %721 = vmatpush.msra.mxu0 %v468
        %722 = vmatpush.msra.mxu0 %v464
        %723 = vmatpush.msra.mxu0 %v460
        %724 = vmatpush.msra.mxu0 %v456
        %725 = vmatpush.msra.mxu0 %v452
        %726 = vmatpush.msra.mxu0 %v448
        %727 = vmatpush.msra.mxu0 %v444
        %728 = vmatpush.msra.mxu0 %v440
        %729 = vmatpush.msra.mxu0 %v436
        %730 = vmatpush.msra.mxu0 %v432
        %731 = vmatpush.msra.mxu0 %v428
        %732 = vmatpush.msra.mxu0 %v424
        %733 = vmatpush.msra.mxu0 %v420
        %734 = vmatpush.msra.mxu0 %v416
        %735 = vmatpush.msra.mxu0 %v412
        %736 = vmatpush.msra.mxu0 %v408
        %737 = vmatmul.f32.gmra.mxu0 %v671
        %v738 = vpop.f32.mrf.mxu0
        %v739 = vadd.f32 %v719, %v738
        %740 = vdwg.mxu0
        %741 = vmatpush.msra.mxu0 %v532
        %742 = vmatpush.msra.mxu0 %v528
        %743 = vmatpush.msra.mxu0 %v524
        %744 = vmatpush.msra.mxu0 %v520
        %745 = vmatpush.msra.mxu0 %v516
        %746 = vmatpush.msra.mxu0 %v512
        %747 = vmatpush.msra.mxu0 %v508
        %748 = vmatpush.msra.mxu0 %v504
        %749 = vmatpush.msra.mxu0 %v500
        %750 = vmatpush.msra.mxu0 %v496
        %751 = vmatpush.msra.mxu0 %v492
        %752 = vmatpush.msra.mxu0 %v488
        %753 = vmatpush.msra.mxu0 %v484
        %754 = vmatpush.msra.mxu0 %v480
        %755 = vmatpush.msra.mxu0 %v476
        %756 = vmatpush.msra.mxu0 %v472
        %757 = vmatmul.f32.gmra.mxu0 %v672
        %v758 = vpop.f32.mrf.mxu0
        %v759 = vadd.f32 %v739, %v758
        %760 = vdwg.mxu0
        %761 = vmatpush.msra.mxu0 %v596
        %762 = vmatpush.msra.mxu0 %v592
        %763 = vmatpush.msra.mxu0 %v588
        %764 = vmatpush.msra.mxu0 %v584
        %765 = vmatpush.msra.mxu0 %v580
        %766 = vmatpush.msra.mxu0 %v576
        %767 = vmatpush.msra.mxu0 %v572
        %768 = vmatpush.msra.mxu0 %v568
        %769 = vmatpush.msra.mxu0 %v564
        %770 = vmatpush.msra.mxu0 %v560
        %771 = vmatpush.msra.mxu0 %v556
        %772 = vmatpush.msra.mxu0 %v552
        %773 = vmatpush.msra.mxu0 %v548
        %774 = vmatpush.msra.mxu0 %v544
        %775 = vmatpush.msra.mxu0 %v540
        %776 = vmatpush.msra.mxu0 %v536
        %777 = vmatmul.f32.gmra.mxu0 %v673
        %v778 = vpop.f32.mrf.mxu0
        %v779 = vadd.f32 %v759, %v778
        %780 = vdwg.mxu0
        %781 = vmatpush.msra.mxu0 %v660
        %782 = vmatpush.msra.mxu0 %v656
        %783 = vmatpush.msra.mxu0 %v652
        %784 = vmatpush.msra.mxu0 %v648
        %785 = vmatpush.msra.mxu0 %v644
        %786 = vmatpush.msra.mxu0 %v640
        %787 = vmatpush.msra.mxu0 %v636
        %788 = vmatpush.msra.mxu0 %v632
        %789 = vmatpush.msra.mxu0 %v628
        %790 = vmatpush.msra.mxu0 %v624
        %791 = vmatpush.msra.mxu0 %v620
        %792 = vmatpush.msra.mxu0 %v616
        %793 = vmatpush.msra.mxu0 %v612
        %794 = vmatpush.msra.mxu0 %v608
        %795 = vmatpush.msra.mxu0 %v604
        %796 = vmatpush.msra.mxu0 %v600
        %797 = vmatmul.f32.gmra.mxu0 %v674
        %v798 = vpop.f32.mrf.mxu0
        %v799 = vadd.f32 %v779, %v798
        %800 = vdwg.mxu0
        %801 = vmatpush.msra.mxu0 %v341
        %802 = vmatpush.msra.mxu0 %v337
        %803 = vmatpush.msra.mxu0 %v333
        %804 = vmatpush.msra.mxu0 %v329
        %805 = vmatpush.msra.mxu0 %v325
        %806 = vmatpush.msra.mxu0 %v321
        %807 = vmatpush.msra.mxu0 %v317
        %808 = vmatpush.msra.mxu0 %v313
        %809 = vmatpush.msra.mxu0 %v309
        %810 = vmatpush.msra.mxu0 %v305
        %811 = vmatpush.msra.mxu0 %v301
        %812 = vmatpush.msra.mxu0 %v297
        %813 = vmatpush.msra.mxu0 %v293
        %814 = vmatpush.msra.mxu0 %v289
        %815 = vmatpush.msra.mxu0 %v285
        %816 = vmatpush.msra.mxu0 %v281
        %817 = vmatmul.f32.gmra.mxu0 %v669
        %v818 = vpop.f32.mrf.mxu0
        %v819 = vadd.f32 0.0, %v818
        %820 = vdwg.mxu0
        %821 = vmatpush.msra.mxu0 %v405
        %822 = vmatpush.msra.mxu0 %v401
        %823 = vmatpush.msra.mxu0 %v397
        %824 = vmatpush.msra.mxu0 %v393
        %825 = vmatpush.msra.mxu0 %v389
        %826 = vmatpush.msra.mxu0 %v385
        %827 = vmatpush.msra.mxu0 %v381
        %828 = vmatpush.msra.mxu0 %v377
        %829 = vmatpush.msra.mxu0 %v373
        %830 = vmatpush.msra.mxu0 %v369
        %831 = vmatpush.msra.mxu0 %v365
        %832 = vmatpush.msra.mxu0 %v361
        %833 = vmatpush.msra.mxu0 %v357
        %834 = vmatpush.msra.mxu0 %v353
        %835 = vmatpush.msra.mxu0 %v349
        %836 = vmatpush.msra.mxu0 %v345
        %837 = vmatmul.f32.gmra.mxu0 %v670
        %v838 = vpop.f32.mrf.mxu0
        %v839 = vadd.f32 %v819, %v838
        %840 = vdwg.mxu0
        %841 = vmatpush.msra.mxu0 %v469
        %842 = vmatpush.msra.mxu0 %v465
        %843 = vmatpush.msra.mxu0 %v461
        %844 = vmatpush.msra.mxu0 %v457
        %845 = vmatpush.msra.mxu0 %v453
        %846 = vmatpush.msra.mxu0 %v449
        %847 = vmatpush.msra.mxu0 %v445
        %848 = vmatpush.msra.mxu0 %v441
        %849 = vmatpush.msra.mxu0 %v437
        %850 = vmatpush.msra.mxu0 %v433
        %851 = vmatpush.msra.mxu0 %v429
        %852 = vmatpush.msra.mxu0 %v425
        %853 = vmatpush.msra.mxu0 %v421
        %854 = vmatpush.msra.mxu0 %v417
        %855 = vmatpush.msra.mxu0 %v413
        %856 = vmatpush.msra.mxu0 %v409
        %857 = vmatmul.f32.gmra.mxu0 %v671
        %v858 = vpop.f32.mrf.mxu0
        %v859 = vadd.f32 %v839, %v858
        %860 = vdwg.mxu0
        %861 = vmatpush.msra.mxu0 %v533
        %862 = vmatpush.msra.mxu0 %v529
        %863 = vmatpush.msra.mxu0 %v525
        %864 = vmatpush.msra.mxu0 %v521
        %865 = vmatpush.msra.mxu0 %v517
        %866 = vmatpush.msra.mxu0 %v513
        %867 = vmatpush.msra.mxu0 %v509
        %868 = vmatpush.msra.mxu0 %v505
        %869 = vmatpush.msra.mxu0 %v501
        %870 = vmatpush.msra.mxu0 %v497
        %871 = vmatpush.msra.mxu0 %v493
        %872 = vmatpush.msra.mxu0 %v489
        %873 = vmatpush.msra.mxu0 %v485
        %874 = vmatpush.msra.mxu0 %v481
        %875 = vmatpush.msra.mxu0 %v477
        %876 = vmatpush.msra.mxu0 %v473
        %877 = vmatmul.f32.gmra.mxu0 %v672
        %v878 = vpop.f32.mrf.mxu0
        %v879 = vadd.f32 %v859, %v878
        %880 = vdwg.mxu0
        %881 = vmatpush.msra.mxu0 %v597
        %882 = vmatpush.msra.mxu0 %v593
        %883 = vmatpush.msra.mxu0 %v589
        %884 = vmatpush.msra.mxu0 %v585
        %885 = vmatpush.msra.mxu0 %v581
        %886 = vmatpush.msra.mxu0 %v577
        %887 = vmatpush.msra.mxu0 %v573
        %888 = vmatpush.msra.mxu0 %v569
        %889 = vmatpush.msra.mxu0 %v565
        %890 = vmatpush.msra.mxu0 %v561
        %891 = vmatpush.msra.mxu0 %v557
        %892 = vmatpush.msra.mxu0 %v553
        %893 = vmatpush.msra.mxu0 %v549
        %894 = vmatpush.msra.mxu0 %v545
        %895 = vmatpush.msra.mxu0 %v541
        %896 = vmatpush.msra.mxu0 %v537
        %897 = vmatmul.f32.gmra.mxu0 %v673
        %v898 = vpop.f32.mrf.mxu0
        %v899 = vadd.f32 %v879, %v898
        %900 = vdwg.mxu0
        %901 = vmatpush.msra.mxu0 %v661
        %902 = vmatpush.msra.mxu0 %v657
        %903 = vmatpush.msra.mxu0 %v653
        %904 = vmatpush.msra.mxu0 %v649
        %905 = vmatpush.msra.mxu0 %v645
        %906 = vmatpush.msra.mxu0 %v641
        %907 = vmatpush.msra.mxu0 %v637
        %908 = vmatpush.msra.mxu0 %v633
        %909 = vmatpush.msra.mxu0 %v629
        %910 = vmatpush.msra.mxu0 %v625
        %911 = vmatpush.msra.mxu0 %v621
        %912 = vmatpush.msra.mxu0 %v617
        %913 = vmatpush.msra.mxu0 %v613
        %914 = vmatpush.msra.mxu0 %v609
        %915 = vmatpush.msra.mxu0 %v605
        %916 = vmatpush.msra.mxu0 %v601
        %917 = vmatmul.f32.gmra.mxu0 %v674
        %v918 = vpop.f32.mrf.mxu0
        %v919 = vadd.f32 %v899, %v918
        %920 = vdwg.mxu0
        %921 = vmatpush.msra.mxu0 %v342
        %922 = vmatpush.msra.mxu0 %v338
        %923 = vmatpush.msra.mxu0 %v334
        %924 = vmatpush.msra.mxu0 %v330
        %925 = vmatpush.msra.mxu0 %v326
        %926 = vmatpush.msra.mxu0 %v322
        %927 = vmatpush.msra.mxu0 %v318
        %928 = vmatpush.msra.mxu0 %v314
        %929 = vmatpush.msra.mxu0 %v310
        %930 = vmatpush.msra.mxu0 %v306
        %931 = vmatpush.msra.mxu0 %v302
        %932 = vmatpush.msra.mxu0 %v298
        %933 = vmatpush.msra.mxu0 %v294
        %934 = vmatpush.msra.mxu0 %v290
        %935 = vmatpush.msra.mxu0 %v286
        %936 = vmatpush.msra.mxu0 %v282
        %937 = vmatmul.f32.gmra.mxu0 %v669
        %v938 = vpop.f32.mrf.mxu0
        %v939 = vadd.f32 0.0, %v938
        %940 = vdwg.mxu0
        %941 = vmatpush.msra.mxu0 %v406
        %942 = vmatpush.msra.mxu0 %v402
        %943 = vmatpush.msra.mxu0 %v398
        %944 = vmatpush.msra.mxu0 %v394
        %945 = vmatpush.msra.mxu0 %v390
        %946 = vmatpush.msra.mxu0 %v386
        %947 = vmatpush.msra.mxu0 %v382
        %948 = vmatpush.msra.mxu0 %v378
        %949 = vmatpush.msra.mxu0 %v374
        %950 = vmatpush.msra.mxu0 %v370
        %951 = vmatpush.msra.mxu0 %v366
        %952 = vmatpush.msra.mxu0 %v362
        %953 = vmatpush.msra.mxu0 %v358
        %954 = vmatpush.msra.mxu0 %v354
        %955 = vmatpush.msra.mxu0 %v350
        %956 = vmatpush.msra.mxu0 %v346
        %957 = vmatmul.f32.gmra.mxu0 %v670
        %v958 = vpop.f32.mrf.mxu0
        %v959 = vadd.f32 %v939, %v958
        %960 = vdwg.mxu0
        %961 = vmatpush.msra.mxu0 %v470
        %962 = vmatpush.msra.mxu0 %v466
        %963 = vmatpush.msra.mxu0 %v462
        %964 = vmatpush.msra.mxu0 %v458
        %965 = vmatpush.msra.mxu0 %v454
        %966 = vmatpush.msra.mxu0 %v450
        %967 = vmatpush.msra.mxu0 %v446
        %968 = vmatpush.msra.mxu0 %v442
        %969 = vmatpush.msra.mxu0 %v438
        %970 = vmatpush.msra.mxu0 %v434
        %971 = vmatpush.msra.mxu0 %v430
        %972 = vmatpush.msra.mxu0 %v426
        %973 = vmatpush.msra.mxu0 %v422
        %974 = vmatpush.msra.mxu0 %v418
        %975 = vmatpush.msra.mxu0 %v414
        %976 = vmatpush.msra.mxu0 %v410
        %977 = vmatmul.f32.gmra.mxu0 %v671
        %v978 = vpop.f32.mrf.mxu0
        %v979 = vadd.f32 %v959, %v978
        %980 = vdwg.mxu0
        %981 = vmatpush.msra.mxu0 %v534
        %982 = vmatpush.msra.mxu0 %v530
        %983 = vmatpush.msra.mxu0 %v526
        %984 = vmatpush.msra.mxu0 %v522
        %985 = vmatpush.msra.mxu0 %v518
        %986 = vmatpush.msra.mxu0 %v514
        %987 = vmatpush.msra.mxu0 %v510
        %988 = vmatpush.msra.mxu0 %v506
        %989 = vmatpush.msra.mxu0 %v502
        %990 = vmatpush.msra.mxu0 %v498
        %991 = vmatpush.msra.mxu0 %v494
        %992 = vmatpush.msra.mxu0 %v490
        %993 = vmatpush.msra.mxu0 %v486
        %994 = vmatpush.msra.mxu0 %v482
        %995 = vmatpush.msra.mxu0 %v478
        %996 = vmatpush.msra.mxu0 %v474
        %997 = vmatmul.f32.gmra.mxu0 %v672
        %v998 = vpop.f32.mrf.mxu0
        %v999 = vadd.f32 %v979, %v998
        %1000 = vdwg.mxu0
        %1001 = vmatpush.msra.mxu0 %v598
        %1002 = vmatpush.msra.mxu0 %v594
        %1003 = vmatpush.msra.mxu0 %v590
        %1004 = vmatpush.msra.mxu0 %v586
        %1005 = vmatpush.msra.mxu0 %v582
        %1006 = vmatpush.msra.mxu0 %v578
        %1007 = vmatpush.msra.mxu0 %v574
        %1008 = vmatpush.msra.mxu0 %v570
        %1009 = vmatpush.msra.mxu0 %v566
        %1010 = vmatpush.msra.mxu0 %v562
        %1011 = vmatpush.msra.mxu0 %v558
        %1012 = vmatpush.msra.mxu0 %v554
        %1013 = vmatpush.msra.mxu0 %v550
        %1014 = vmatpush.msra.mxu0 %v546
        %1015 = vmatpush.msra.mxu0 %v542
        %1016 = vmatpush.msra.mxu0 %v538
        %1017 = vmatmul.f32.gmra.mxu0 %v673
        %v1018 = vpop.f32.mrf.mxu0
        %v1019 = vadd.f32 %v999, %v1018
        %1020 = vdwg.mxu0
        %1021 = vmatpush.msra.mxu0 %v662
        %1022 = vmatpush.msra.mxu0 %v658
        %1023 = vmatpush.msra.mxu0 %v654
        %1024 = vmatpush.msra.mxu0 %v650
        %1025 = vmatpush.msra.mxu0 %v646
        %1026 = vmatpush.msra.mxu0 %v642
        %1027 = vmatpush.msra.mxu0 %v638
        %1028 = vmatpush.msra.mxu0 %v634
        %1029 = vmatpush.msra.mxu0 %v630
        %1030 = vmatpush.msra.mxu0 %v626
        %1031 = vmatpush.msra.mxu0 %v622
        %1032 = vmatpush.msra.mxu0 %v618
        %1033 = vmatpush.msra.mxu0 %v614
        %1034 = vmatpush.msra.mxu0 %v610
        %1035 = vmatpush.msra.mxu0 %v606
        %1036 = vmatpush.msra.mxu0 %v602
        %1037 = vmatmul.f32.gmra.mxu0 %v674
        %v1038 = vpop.f32.mrf.mxu0
        %v1039 = vadd.f32 %v1019, %v1038
        %1040 = vdwg.mxu0
        %1041 = vmatpush.msra.mxu0 %v343
        %1042 = vmatpush.msra.mxu0 %v339
        %1043 = vmatpush.msra.mxu0 %v335
        %1044 = vmatpush.msra.mxu0 %v331
        %1045 = vmatpush.msra.mxu0 %v327
        %1046 = vmatpush.msra.mxu0 %v323
        %1047 = vmatpush.msra.mxu0 %v319
        %1048 = vmatpush.msra.mxu0 %v315
        %1049 = vmatpush.msra.mxu0 %v311
        %1050 = vmatpush.msra.mxu0 %v307
        %1051 = vmatpush.msra.mxu0 %v303
        %1052 = vmatpush.msra.mxu0 %v299
        %1053 = vmatpush.msra.mxu0 %v295
        %1054 = vmatpush.msra.mxu0 %v291
        %1055 = vmatpush.msra.mxu0 %v287
        %1056 = vmatpush.msra.mxu0 %v283
        %1057 = vmatmul.f32.gmra.mxu0 %v669
        %v1058 = vpop.f32.mrf.mxu0
        %v1059 = vadd.f32 0.0, %v1058
        %1060 = vdwg.mxu0
        %1061 = vmatpush.msra.mxu0 %v407
        %1062 = vmatpush.msra.mxu0 %v403
        %1063 = vmatpush.msra.mxu0 %v399
        %1064 = vmatpush.msra.mxu0 %v395
        %1065 = vmatpush.msra.mxu0 %v391
        %1066 = vmatpush.msra.mxu0 %v387
        %1067 = vmatpush.msra.mxu0 %v383
        %1068 = vmatpush.msra.mxu0 %v379
        %1069 = vmatpush.msra.mxu0 %v375
        %1070 = vmatpush.msra.mxu0 %v371
        %1071 = vmatpush.msra.mxu0 %v367
        %1072 = vmatpush.msra.mxu0 %v363
        %1073 = vmatpush.msra.mxu0 %v359
        %1074 = vmatpush.msra.mxu0 %v355
        %1075 = vmatpush.msra.mxu0 %v351
        %1076 = vmatpush.msra.mxu0 %v347
        %1077 = vmatmul.f32.gmra.mxu0 %v670
        %v1078 = vpop.f32.mrf.mxu0
        %v1079 = vadd.f32 %v1059, %v1078
        %1080 = vdwg.mxu0
        %1081 = vmatpush.msra.mxu0 %v471
        %1082 = vmatpush.msra.mxu0 %v467
        %1083 = vmatpush.msra.mxu0 %v463
        %1084 = vmatpush.msra.mxu0 %v459
        %1085 = vmatpush.msra.mxu0 %v455
        %1086 = vmatpush.msra.mxu0 %v451
        %1087 = vmatpush.msra.mxu0 %v447
        %1088 = vmatpush.msra.mxu0 %v443
        %1089 = vmatpush.msra.mxu0 %v439
        %1090 = vmatpush.msra.mxu0 %v435
        %1091 = vmatpush.msra.mxu0 %v431
        %1092 = vmatpush.msra.mxu0 %v427
        %1093 = vmatpush.msra.mxu0 %v423
        %1094 = vmatpush.msra.mxu0 %v419
        %1095 = vmatpush.msra.mxu0 %v415
        %1096 = vmatpush.msra.mxu0 %v411
        %1097 = vmatmul.f32.gmra.mxu0 %v671
        %v1098 = vpop.f32.mrf.mxu0
        %v1099 = vadd.f32 %v1079, %v1098
        %1100 = vdwg.mxu0
        %1101 = vmatpush.msra.mxu0 %v535
        %1102 = vmatpush.msra.mxu0 %v531
        %1103 = vmatpush.msra.mxu0 %v527
        %1104 = vmatpush.msra.mxu0 %v523
        %1105 = vmatpush.msra.mxu0 %v519
        %1106 = vmatpush.msra.mxu0 %v515
        %1107 = vmatpush.msra.mxu0 %v511
        %1108 = vmatpush.msra.mxu0 %v507
        %1109 = vmatpush.msra.mxu0 %v503
        %1110 = vmatpush.msra.mxu0 %v499
        %1111 = vmatpush.msra.mxu0 %v495
        %1112 = vmatpush.msra.mxu0 %v491
        %1113 = vmatpush.msra.mxu0 %v487
        %1114 = vmatpush.msra.mxu0 %v483
        %1115 = vmatpush.msra.mxu0 %v479
        %1116 = vmatpush.msra.mxu0 %v475
        %1117 = vmatmul.f32.gmra.mxu0 %v672
        %v1118 = vpop.f32.mrf.mxu0
        %v1119 = vadd.f32 %v1099, %v1118
        %1120 = vdwg.mxu0
        %1121 = vmatpush.msra.mxu0 %v599
        %1122 = vmatpush.msra.mxu0 %v595
        %1123 = vmatpush.msra.mxu0 %v591
        %1124 = vmatpush.msra.mxu0 %v587
        %1125 = vmatpush.msra.mxu0 %v583
        %1126 = vmatpush.msra.mxu0 %v579
        %1127 = vmatpush.msra.mxu0 %v575
        %1128 = vmatpush.msra.mxu0 %v571
        %1129 = vmatpush.msra.mxu0 %v567
        %1130 = vmatpush.msra.mxu0 %v563
        %1131 = vmatpush.msra.mxu0 %v559
        %1132 = vmatpush.msra.mxu0 %v555
        %1133 = vmatpush.msra.mxu0 %v551
        %1134 = vmatpush.msra.mxu0 %v547
        %1135 = vmatpush.msra.mxu0 %v543
        %1136 = vmatpush.msra.mxu0 %v539
        %1137 = vmatmul.f32.gmra.mxu0 %v673
        %v1138 = vpop.f32.mrf.mxu0
        %v1139 = vadd.f32 %v1119, %v1138
        %1140 = vdwg.mxu0
        %1141 = vmatpush.msra.mxu0 %v663
        %1142 = vmatpush.msra.mxu0 %v659
        %1143 = vmatpush.msra.mxu0 %v655
        %1144 = vmatpush.msra.mxu0 %v651
        %1145 = vmatpush.msra.mxu0 %v647
        %1146 = vmatpush.msra.mxu0 %v643
        %1147 = vmatpush.msra.mxu0 %v639
        %1148 = vmatpush.msra.mxu0 %v635
        %1149 = vmatpush.msra.mxu0 %v631
        %1150 = vmatpush.msra.mxu0 %v627
        %1151 = vmatpush.msra.mxu0 %v623
        %1152 = vmatpush.msra.mxu0 %v619
        %1153 = vmatpush.msra.mxu0 %v615
        %1154 = vmatpush.msra.mxu0 %v611
        %1155 = vmatpush.msra.mxu0 %v607
        %1156 = vmatpush.msra.mxu0 %v603
        %1157 = vmatmul.f32.gmra.mxu0 %v674
        %v1158 = vpop.f32.mrf.mxu0
        %v1159 = vadd.f32 %v1139, %v1158
        %1160 = vdwg.mxu0
        %v1165 = vrot.slane %v919, 6
        %v1166 = vrot.slane %v1039, 4
        %v1167 = vrot.slane %v1159, 2
        %vm1168 = vcmask 1041408
        %v1169 = vsel %vm1168, %v799, %v1165
        %vm1170 = vcmask 1045508
        %v1171 = vsel %vm1170, %v1166, %v1167
        %vm1172 = vcmask 1043456
        %v1173 = vsel %vm1172, %v1169, %v1171
        %v1175 = vadd.f32 %v277, %v1173
        %1176 = vst [vmem:[%s266] sm:$0xff] %v1175
        // Predicated region
        $region49: #{tpu_custom_call.1} parent=31 // pred_check
          %p1177 = pneg %p272
        $region50: #{tpu_custom_call.1} parent=31 // pred_check_branch
          %1179 = sbr.rel (%p1177) target = $region52
        $region51: #{tpu_custom_call.1} parent=31 // pred_region
          %v1180 = vld [vmem:[%s266] sm:$0xff]
          %v1181 = vld [vmem:[%s238] sm:$0xf]
          %v1183 = vperm.slane %v1181, 0
          %v1184 = vperm.slane %v1181, 1
          %v1185 = vperm.slane %v1181, 2
          %v1186 = vperm.slane %v1181, 3
          %v1187 = vrot.slane %v1184, 6
          %v1188 = vrot.slane %v1185, 4
          %v1189 = vrot.slane %v1186, 2
          %v1190 = vsel %vm1168, %v1183, %v1187
          %v1191 = vsel %vm1170, %v1188, %v1189
          %v1192 = vsel %vm1172, %v1190, %v1191
          %v1194 = vadd.f32 %v1180, %v1192
          %v1195 = vsub.f32 %v1194, 0.236
          %v1196 = vmax.f32 %v1195, 0.0
          %1197 = vst [vmem:[%s266] sm:$0xff] %v1196
        $region52: #{tpu_custom_call.1} parent=31 // pred_fallthru
          _
        %s1198 = sand.u32 %s121, 1
        %s1199 = scalar_lea.sflag [#allocation4], %s1198
        %s1200 = sand.u32 %s121, 1
        %s1201 = smul.addr %s1200, 8
        %s1202 = scalar_lea.vmem [#allocation8], %s1201
        // Predicated region
        $region53: #{tpu_custom_call.1} parent=31 // pred_check
          %p1203 = pneg %p131
        $region54: #{tpu_custom_call.1} parent=31 // pred_check_branch
          %1205 = sbr.rel (%p1203) target = $region56
        $region55: #{tpu_custom_call.1} parent=31 // pred_region
          %s1206 = smul.u32 4, %s25
          %1208 = vsyncadd %s1199, 0
          %s1209 = smul.addr %s1206, 2
          %s1210 = scalar_lea.hbm %s3, %s1209
          %s1212 = sshll.u32 %s1202, 4
          %s1213 = int_to_ptr.vmem [resolvable:$true] %s1212
          %s1214 = sshll.u32 %s1210, 4
          %s1215 = int_to_ptr.hbm [resolvable:$true] %s1214
          %1217 = dma.vmem_to_hbm [thread:$0]  %s1213, 128, %s1215, %s1199
        $region56: #{tpu_custom_call.1} parent=31 // pred_fallthru
          _
      $region32: #{tpu_custom_call.1} parent=5 // pred_fallthru
        _
      %p1218 = scmp.le.s32.totalorder 2, %s16
      // Predicated region
      $region57: #{tpu_custom_call.1} parent=5 // pred_check
        %p1219 = pneg %p1218
      $region58: #{tpu_custom_call.1} parent=5 // pred_check_branch
        %1221 = sbr.rel (%p1219) target = $region60
      $region59: #{tpu_custom_call.1} parent=5 // pred_region
        %s1222 = ssub.s32 %s16, 2
        // Predicated region
        $region61: #{tpu_custom_call.1} parent=59 // pred_check
          %p1223 = pneg %p137
        $region62: #{tpu_custom_call.1} parent=59 // pred_check_branch
          %1225 = sbr.rel (%p1223) target = $region64
        $region63: #{tpu_custom_call.1} parent=59 // pred_region
          %s1226 = sand.u32 %s122, 1
          %s1227 = scalar_lea.sflag [#allocation4], %s1226
          %s1228 = sand.u32 %s122, 1
          %s1229 = smul.addr %s1228, 8
          %s1230 = scalar_lea.vmem [#allocation8], %s1229
          %1232 = dma.done %s1227, 128
        $region64: #{tpu_custom_call.1} parent=59 // pred_fallthru
          _
      $region60: #{tpu_custom_call.1} parent=5 // pred_fallthru
        _
    $region6: #{tpu_custom_call.1} parent=1 // loop_footer
      %s20 = sadd.s32 1, %s16
    $region7: #{tpu_custom_call.1} parent=1 // loop_footer_branch
      %15 = sbr.rel target = $region3
    $region8: #{tpu_custom_call.1} parent=1 // loop_exit
      _
    %1233 = vsyncpa [#allocation3], 1
    %s1234 = scalar_lea.sflag [#allocation3], 1
    %1235 = vsyncpa %s1234, 1
    %1236 = vsyncpa [#allocation6], 1
    %s1237 = scalar_lea.sflag [#allocation6], 1
    %1238 = vsyncpa %s1237, 1
    %1239 = vsyncpa [#allocation4], 1
    %s1240 = scalar_lea.sflag [#allocation4], 1
    %1241 = vsyncpa %s1240, 1

</llo_original>
